<compile_context>
chip_gen: v6e
topology: v6e:2x2x1
jax: 0.10.0
libtpu: 0.0.40
codegen_flags: <defaults>
</compile_context>

<pallas_src>
import functools

import jax
import jax.numpy as jnp
from jax.experimental import pallas as pl
from jax.experimental.pallas import tpu as pltpu

_MAX_ROWS_PER_TILE = 2048  # 4 streams x 2 bufs x 2048 x 128 x 4B = 8 MiB VMEM


def _pick_tile_rows(n, d, itemsize, n_streams,
                    max_rows=_MAX_ROWS_PER_TILE,
                    vmem_budget_bytes=12 * 1024 * 1024):
    """Largest (8-aligned) row tile that keeps double-buffered inputs in VMEM."""
    cap = vmem_budget_bytes // max(1, n_streams * 2 * d * itemsize)
    cap = max(8, (cap // 8) * 8)
    tn = min(max_rows, cap)
    if n <= tn:
        return n          # full array -> block dim equals array dim (always legal)
    return tn             # multiple of 8 -> satisfies (8,128) block constraint


def _row_diag_dist(a_ref, b_ref, *, tile_start, n_rows, needs_mask):
    """Per-row diagonal distance for the current (TN, D) tile.

    diag(distance_matrix_vector(a, b))[r] == sqrt(|a_r - b_r|^2 + 1e-6).
    Returns a (TN, 1) f32 column; padded tail rows are discarded via select
    (not multiply), so garbage / inf in the block pad never propagates.
    """
    d = a_ref[...].astype(jnp.float32) - b_ref[...].astype(jnp.float32)
    r = jnp.sqrt(jnp.sum(d * d, axis=1, keepdims=True) + 1e-6)      # (TN, 1)
    if needs_mask:
        tn = a_ref.shape[0]
        row = tile_start + jax.lax.broadcasted_iota(jnp.int32, (tn, 1), 0)
        r = jnp.where(row < n_rows, r, 0.0)
    return r


def _pair_loss_fused_kernel(a1_ref, b1_ref, a2_ref, b2_ref, out_ref,
                            acc1_ref, acc2_ref, *, n_rows, pair_w, needs_mask):
    """Fused kernel for two image pairs with identical (N, D) shapes.

    out_ref : (1,1) f32 SMEM = (mean1 + mean2) / 2 * PAIR_W
    acc*_ref: (TN,1) f32 VMEM per-row running sums (persist across the grid).
    """
    i = pl.program_id(0)
    tn = a1_ref.shape[0]

    @pl.when(i == 0)
    def _init():
        acc1_ref[...] = jnp.zeros_like(acc1_ref)
        acc2_ref[...] = jnp.zeros_like(acc2_ref)

    start = i * tn
    acc1_ref[...] += _row_diag_dist(a1_ref, b1_ref, tile_start=start,
                                    n_rows=n_rows, needs_mask=needs_mask)
    acc2_ref[...] += _row_diag_dist(a2_ref, b2_ref, tile_start=start,
                                    n_rows=n_rows, needs_mask=needs_mask)

    @pl.when(i == pl.num_programs(0) - 1)
    def _finalize():
        # (sum1/N + sum2/N) / 2 * PAIR_W == (sum1 + sum2) * (0.5 * PAIR_W / N)
        scale = jnp.float32(0.5 * pair_w / n_rows)
        out_ref[0, 0] = (jnp.sum(acc1_ref[...]) + jnp.sum(acc2_ref[...])) * scale


def _diag_dist_sum_kernel(a_ref, b_ref, out_ref, acc_ref, *, n_rows, needs_mask):
    """Sum_i sqrt(|a_i - b_i|^2 + 1e-6) for one pair (used when N1 != N2)."""
    i = pl.program_id(0)
    tn = a_ref.shape[0]

    @pl.when(i == 0)
    def _init():
        acc_ref[...] = jnp.zeros_like(acc_ref)

    acc_ref[...] += _row_diag_dist(a_ref, b_ref, tile_start=i * tn,
                                   n_rows=n_rows, needs_mask=needs_mask)

    @pl.when(i == pl.num_programs(0) - 1)
    def _finalize():
        out_ref[0, 0] = jnp.sum(acc_ref[...])


def diag_dist_sum(a, b, *, max_rows_per_tile=_MAX_ROWS_PER_TILE):
    """Pallas reduction: sum over rows of diag(distance_matrix_vector(a, b))."""
    assert a.shape == b.shape and a.ndim == 2
    N, D = a.shape
    tn = _pick_tile_rows(N, D, jnp.dtype(a.dtype).itemsize, n_streams=2,
                         max_rows=max_rows_per_tile)
    grid = (pl.cdiv(N, tn),)
    needs_mask = (N % tn) != 0

    kernel = functools.partial(_diag_dist_sum_kernel, n_rows=N,
                               needs_mask=needs_mask)
    spec = pl.BlockSpec((tn, D), lambda i: (i, 0))
    out = pl.pallas_call(
        kernel,
        out_shape=jax.ShapeDtypeStruct((1, 1), jnp.float32),
        grid=grid,
        in_specs=[spec, spec],
        out_specs=pl.BlockSpec((1, 1), lambda i: (0, 0),
                               memory_space=pltpu.SMEM),
        scratch_shapes=[pltpu.VMEM((tn, 1), jnp.float32)],
        compiler_params=pltpu.CompilerParams(
            dimension_semantics=("arbitrary",)),
    )(a, b)
    return out[0, 0]


def pair_loss_fused(im1_l, im1_r, im2_l, im2_r, *, pair_w=1.0,
                    max_rows_per_tile=_MAX_ROWS_PER_TILE):
    """(diag_mean(im1_l, im1_r) + diag_mean(im2_l, im2_r)) / 2 * PAIR_W."""
    assert im1_l.shape == im1_r.shape and im1_l.ndim == 2
    assert im2_l.shape == im2_r.shape and im2_l.ndim == 2

    if im1_l.shape != im2_l.shape:
        # Different keypoint counts per image pair: each mean uses its own N.
        s1 = diag_dist_sum(im1_l, im1_r, max_rows_per_tile=max_rows_per_tile)
        s2 = diag_dist_sum(im2_l, im2_r, max_rows_per_tile=max_rows_per_tile)
        n1, n2 = im1_l.shape[0], im2_l.shape[0]
        return (s1 / n1 + s2 / n2) * jnp.float32(0.5 * pair_w)

    N, D = im1_l.shape
    tn = _pick_tile_rows(N, D, jnp.dtype(im1_l.dtype).itemsize, n_streams=4,
                         max_rows=max_rows_per_tile)
    grid = (pl.cdiv(N, tn),)
    needs_mask = (N % tn) != 0

    kernel = functools.partial(_pair_loss_fused_kernel, n_rows=N,
                               pair_w=float(pair_w), needs_mask=needs_mask)
    spec = pl.BlockSpec((tn, D), lambda i: (i, 0))
    out = pl.pallas_call(
        kernel,
        out_shape=jax.ShapeDtypeStruct((1, 1), jnp.float32),
        grid=grid,
        in_specs=[spec, spec, spec, spec],
        out_specs=pl.BlockSpec((1, 1), lambda i: (0, 0),
                               memory_space=pltpu.SMEM),
        scratch_shapes=[pltpu.VMEM((tn, 1), jnp.float32),
                        pltpu.VMEM((tn, 1), jnp.float32)],
        compiler_params=pltpu.CompilerParams(
            dimension_semantics=("arbitrary",)),
    )(im1_l, im1_r, im2_l, im2_r)
    return out[0, 0]


class RFNetModuleJax:
    """JAX/Pallas port of RFNetModule's self-contained compute.

    det / des are external sub-networks in the original repo; only the math
    defined inside rf_net_module.py itself is reproduced here.
    """

    def __init__(self, SCORE_W=1.0, PAIR_W=1.0):
        self.SCORE_W = SCORE_W
        self.PAIR_W = PAIR_W

    def forward(self, **kwargs):
        # Original PyTorch forward() body is `pass`.
        return None

    def pair_loss(self, im1_lpreddes, im1_rpreddes, im2_lpreddes, im2_rpreddes):
        """pair_loss term of criterion(), fused into a single Pallas kernel."""
        return pair_loss_fused(im1_lpreddes, im1_rpreddes,
                               im2_lpreddes, im2_rpreddes,
                               pair_w=self.PAIR_W)

    # TODO(synk): gtscore() depends on filter_border / warp / self.det.process
    #             (external modules, not defined in rf_net_module.py).
    # TODO(synk): criterion()'s score_loss / hard_loss call self.det.loss /
    #             self.des.loss (external sub-modules) — not translatable here.
    # TODO(synk): gt_scale_orin() is homography warp + data-dependent gather;
    #             left to plain JAX, not ported to a Pallas kernel.


def _pair_loss_ref(a1, b1, a2, b2, pair_w=1.0):
    """Plain-JAX reference mirroring torch distance_matrix_vector + diag.mean."""
    def diag_mean(a, b):
        a = a.astype(jnp.float32)
        b = b.astype(jnp.float32)
        d1 = jnp.sum(a * a, axis=1, keepdims=True)
        d2 = jnp.sum(b * b, axis=1, keepdims=True)
        dist = jnp.sqrt(d1 + d2.T - 2.0 * (a @ b.T) + 1e-6)
        return jnp.mean(jnp.diagonal(dist))
    return (diag_mean(a1, b1) + diag_mean(a2, b2)) / 2.0 * pair_w


if __name__ == "__main__":
    key = jax.random.PRNGKey(0)

    def make_desc(k, n, d, dtype=jnp.float32):
        x = jax.random.normal(k, (n, d), dtype=jnp.float32)
        x = x / (jnp.linalg.norm(x, axis=1, keepdims=True) + 1e-8)
        return x.astype(dtype)

    module = RFNetModuleJax(SCORE_W=1.0, PAIR_W=1.0)
    keys = jax.random.split(key, 12)

    # Case 1: 128 keypoints x 128-d descriptors (single tile, fused kernel).
    N, D = 128, 128
    a1, b1, a2, b2 = (make_desc(keys[0], N, D), make_desc(keys[1], N, D),
                      make_desc(keys[2], N, D), make_desc(keys[3], N, D))
    loss = jax.block_until_ready(module.pair_loss(a1, b1, a2, b2))
    ref = _pair_loss_ref(a1, b1, a2, b2, pair_w=1.0)
    assert jnp.allclose(loss, ref, rtol=1e-4, atol=1e-5), (loss, ref)

    # Case 2: 300 keypoints with 128-row tiles -> grid of 3 with a padded tail,
    # exercising the persistent VMEM accumulator and the last-block row mask.
    N2 = 300
    c1, d1, c2, d2 = (make_desc(keys[4], N2, D), make_desc(keys[5], N2, D),
                      make_desc(keys[6], N2, D), make_desc(keys[7], N2, D))
    loss2 = jax.block_until_ready(
        pair_loss_fused(c1, d1, c2, d2, pair_w=1.0, max_rows_per_tile=128))
    ref2 = _pair_loss_ref(c1, d1, c2, d2, pair_w=1.0)
    assert jnp.allclose(loss2, ref2, rtol=1e-4, atol=1e-5), (loss2, ref2)

    # Case 3: different keypoint counts per image pair (per-pair denominators).
    e1, f1 = make_desc(keys[8], 128, D), make_desc(keys[9], 128, D)
    e2, f2 = make_desc(keys[10], 192, D), make_desc(keys[11], 192, D)
    loss3 = jax.block_until_ready(module.pair_loss(e1, f1, e2, f2))
    ref3 = _pair_loss_ref(e1, f1, e1, f1, 1.0) * 0.5 \
         + _pair_loss_ref(e2, f2, e2, f2, 1.0) * 0.5
    assert jnp.allclose(loss3, ref3, rtol=1e-4, atol=1e-5), (loss3, ref3)

    # Case 4: bf16 descriptors (bandwidth path); f32 accumulation in-kernel.
    g1, h1, g2, h2 = (make_desc(keys[0], N, D, jnp.bfloat16),
                      make_desc(keys[1], N, D, jnp.bfloat16),
                      make_desc(keys[2], N, D, jnp.bfloat16),
                      make_desc(keys[3], N, D, jnp.bfloat16))
    loss4 = jax.block_until_ready(module.pair_loss(g1, h1, g2, h2))
    ref4 = _pair_loss_ref(g1, h1, g2, h2, pair_w=1.0)
    assert jnp.allclose(loss4, ref4, rtol=2e-2, atol=2e-3), (loss4, ref4)

    print("KERNEL_OK")
</pallas_src>

<mosaic_0001>
module attributes {stable_mosaic.version = 11 : i64} {
  func.func @_pair_loss_fused_kernel(%arg0: i32, %arg1: memref<128x128xf32, #tpu.memory_space<vmem>>, %arg2: memref<128x128xf32, #tpu.memory_space<vmem>>, %arg3: memref<128x128xf32, #tpu.memory_space<vmem>>, %arg4: memref<128x128xf32, #tpu.memory_space<vmem>>, %arg5: memref<1x1xf32, #tpu.memory_space<smem>>, %arg6: memref<128x1xf32, #tpu.memory_space<vmem>>, %arg7: memref<128x1xf32, #tpu.memory_space<vmem>>) attributes {dimension_semantics = [#tpu.dimension_semantics<arbitrary>], iteration_bounds = array<i64: 1>, scalar_prefetch = 0 : i64, scratch_operands = 2 : i64, tpu.core_type = #tpu.core_type<tc>, window_params = [{transform_indices = @transform_0, window_bounds = array<i64: 128, 128>}, {transform_indices = @transform_1, window_bounds = array<i64: 128, 128>}, {transform_indices = @transform_2, window_bounds = array<i64: 128, 128>}, {transform_indices = @transform_3, window_bounds = array<i64: 128, 128>}, {transform_indices = @transform_4, window_bounds = array<i64: 1, 1>}]} {
    %c0_i32 = arith.constant 0 : i32
    %0 = arith.cmpi eq, %arg0, %c0_i32 : i32
    %1 = arith.extui %0 : i1 to i32
    %c0_i32_0 = arith.constant 0 : i32
    %2 = arith.cmpi ne, %1, %c0_i32_0 : i32
    scf.if %2 {
      %cst_21 = arith.constant 0.000000e+00 : f32
      %30 = vector.broadcast %cst_21 : f32 to vector<128x1xf32>
      %c0_22 = arith.constant 0 : index
      %c0_23 = arith.constant 0 : index
      %31 = vector.load %arg6[%c0_22, %c0_23] : memref<128x1xf32, #tpu.memory_space<vmem>>, vector<128x1xf32>
      tpu.vector_store %arg6[%c0_22, %c0_23], %30 {strides = array<i32>} : memref<128x1xf32, #tpu.memory_space<vmem>>, vector<128x1xf32>,
      %cst_24 = arith.constant 0.000000e+00 : f32
      %32 = vector.broadcast %cst_24 : f32 to vector<128x1xf32>
      %c0_25 = arith.constant 0 : index
      %c0_26 = arith.constant 0 : index
      %33 = vector.load %arg7[%c0_25, %c0_26] : memref<128x1xf32, #tpu.memory_space<vmem>>, vector<128x1xf32>
      tpu.vector_store %arg7[%c0_25, %c0_26], %32 {strides = array<i32>} : memref<128x1xf32, #tpu.memory_space<vmem>>, vector<128x1xf32>,
    } else {
    }
    %c0 = arith.constant 0 : index
    %c0_1 = arith.constant 0 : index
    %3 = vector.load %arg6[%c0, %c0_1] : memref<128x1xf32, #tpu.memory_space<vmem>>, vector<128x1xf32>
    %c0_2 = arith.constant 0 : index
    %c0_3 = arith.constant 0 : index
    %4 = vector.load %arg1[%c0_2, %c0_3] : memref<128x128xf32, #tpu.memory_space<vmem>>, vector<128x128xf32>
    %c0_4 = arith.constant 0 : index
    %c0_5 = arith.constant 0 : index
    %5 = vector.load %arg2[%c0_4, %c0_5] : memref<128x128xf32, #tpu.memory_space<vmem>>, vector<128x128xf32>
    %6 = arith.subf %4, %5 : vector<128x128xf32>
    %7 = arith.mulf %6, %6 : vector<128x128xf32>
    %cst = arith.constant dense<0.000000e+00> : vector<128xf32>
    %8 = vector.multi_reduction <add>, %7, %cst [1] : vector<128x128xf32> to vector<128xf32>
    %9 = vector.shape_cast %8 : vector<128xf32> to vector<128x1xf32>
    %cst_6 = arith.constant 9.99999997E-7 : f32
    %10 = vector.broadcast %cst_6 : f32 to vector<128x1xf32>
    %11 = arith.addf %9, %10 : vector<128x1xf32>
    %12 = math.sqrt %11 : vector<128x1xf32>
    %13 = arith.addf %3, %12 : vector<128x1xf32>
    %c0_7 = arith.constant 0 : index
    %c0_8 = arith.constant 0 : index
    %14 = vector.load %arg6[%c0_7, %c0_8] : memref<128x1xf32, #tpu.memory_space<vmem>>, vector<128x1xf32>
    tpu.vector_store %arg6[%c0_7, %c0_8], %13 {strides = array<i32>} : memref<128x1xf32, #tpu.memory_space<vmem>>, vector<128x1xf32>,
    %c0_9 = arith.constant 0 : index
    %c0_10 = arith.constant 0 : index
    %15 = vector.load %arg7[%c0_9, %c0_10] : memref<128x1xf32, #tpu.memory_space<vmem>>, vector<128x1xf32>
    %c0_11 = arith.constant 0 : index
    %c0_12 = arith.constant 0 : index
    %16 = vector.load %arg3[%c0_11, %c0_12] : memref<128x128xf32, #tpu.memory_space<vmem>>, vector<128x128xf32>
    %c0_13 = arith.constant 0 : index
    %c0_14 = arith.constant 0 : index
    %17 = vector.load %arg4[%c0_13, %c0_14] : memref<128x128xf32, #tpu.memory_space<vmem>>, vector<128x128xf32>
    %18 = arith.subf %16, %17 : vector<128x128xf32>
    %19 = arith.mulf %18, %18 : vector<128x128xf32>
    %cst_15 = arith.constant dense<0.000000e+00> : vector<128xf32>
    %20 = vector.multi_reduction <add>, %19, %cst_15 [1] : vector<128x128xf32> to vector<128xf32>
    %21 = vector.shape_cast %20 : vector<128xf32> to vector<128x1xf32>
    %cst_16 = arith.constant 9.99999997E-7 : f32
    %22 = vector.broadcast %cst_16 : f32 to vector<128x1xf32>
    %23 = arith.addf %21, %22 : vector<128x1xf32>
    %24 = math.sqrt %23 : vector<128x1xf32>
    %25 = arith.addf %15, %24 : vector<128x1xf32>
    %c0_17 = arith.constant 0 : index
    %c0_18 = arith.constant 0 : index
    %26 = vector.load %arg7[%c0_17, %c0_18] : memref<128x1xf32, #tpu.memory_space<vmem>>, vector<128x1xf32>
    tpu.vector_store %arg7[%c0_17, %c0_18], %25 {strides = array<i32>} : memref<128x1xf32, #tpu.memory_space<vmem>>, vector<128x1xf32>,
    %c0_i32_19 = arith.constant 0 : i32
    %27 = arith.cmpi eq, %arg0, %c0_i32_19 : i32
    %28 = arith.extui %27 : i1 to i32
    %c0_i32_20 = arith.constant 0 : i32
    %29 = arith.cmpi ne, %28, %c0_i32_20 : i32
    scf.if %29 {
      %c0_21 = arith.constant 0 : index
      %c0_22 = arith.constant 0 : index
      %30 = vector.load %arg6[%c0_21, %c0_22] : memref<128x1xf32, #tpu.memory_space<vmem>>, vector<128x1xf32>
      %31 = vector.shape_cast %30 : vector<128x1xf32> to vector<1x128x1xf32>
      %cst_23 = arith.constant dense<0.000000e+00> : vector<1xf32>
      %32 = vector.multi_reduction <add>, %31, %cst_23 [1, 2] : vector<1x128x1xf32> to vector<1xf32>
      %33 = vector.shape_cast %32 : vector<1xf32> to vector<1x1x1xf32>
      %34 = vector.extract %33[0, 0, 0] : f32 from vector<1x1x1xf32>
      %c0_24 = arith.constant 0 : index
      %c0_25 = arith.constant 0 : index
      %35 = vector.load %arg7[%c0_24, %c0_25] : memref<128x1xf32, #tpu.memory_space<vmem>>, vector<128x1xf32>
      %36 = vector.shape_cast %35 : vector<128x1xf32> to vector<1x128x1xf32>
      %cst_26 = arith.constant dense<0.000000e+00> : vector<1xf32>
      %37 = vector.multi_reduction <add>, %36, %cst_26 [1, 2] : vector<1x128x1xf32> to vector<1xf32>
      %38 = vector.shape_cast %37 : vector<1xf32> to vector<1x1x1xf32>
      %39 = vector.extract %38[0, 0, 0] : f32 from vector<1x1x1xf32>
      %40 = arith.addf %34, %39 : f32
      %cst_27 = arith.constant 3.906250e-03 : f32
      %41 = arith.mulf %40, %cst_27 : f32
      %c0_28 = arith.constant 0 : index
      %c0_29 = arith.constant 0 : index
      %42 = memref.load %arg5[%c0_28, %c0_29] : memref<1x1xf32, #tpu.memory_space<smem>>
      memref.store %41, %arg5[%c0_28, %c0_29] : memref<1x1xf32, #tpu.memory_space<smem>>
    } else {
    }
    return
  }
  func.func @transform_0(%arg0: i32) -> (i32, i32) {
    %c0_i32 = arith.constant 0 : i32
    %c0_i32_0 = arith.constant 0 : i32
    return %arg0, %c0_i32 : i32, i32
  }
  func.func @transform_1(%arg0: i32) -> (i32, i32) {
    %c0_i32 = arith.constant 0 : i32
    %c0_i32_0 = arith.constant 0 : i32
    return %arg0, %c0_i32 : i32, i32
  }
  func.func @transform_2(%arg0: i32) -> (i32, i32) {
    %c0_i32 = arith.constant 0 : i32
    %c0_i32_0 = arith.constant 0 : i32
    return %arg0, %c0_i32 : i32, i32
  }
  func.func @transform_3(%arg0: i32) -> (i32, i32) {
    %c0_i32 = arith.constant 0 : i32
    %c0_i32_0 = arith.constant 0 : i32
    return %arg0, %c0_i32 : i32, i32
  }
  func.func @transform_4(%arg0: i32) -> (i32, i32) {
    %c0_i32 = arith.constant 0 : i32
    %c0_i32_0 = arith.constant 0 : i32
    %c0_i32_1 = arith.constant 0 : i32
    return %c0_i32, %c0_i32_0 : i32, i32
  }
}

</mosaic_0001>

<llo_original>
// kernel: tpu_custom_call.1
$region0: #{tpu_custom_call.1}
  #allocation0 [shape = 'u32[]', space=smem, size = 0x4, offset = 0x4, fixed_abs, tag = 'smem constant byte address 0x4 - core index']
  #allocation1 [shape = 'u32[144,128]{1,0:T(1,128)}', space=vmem, size = 0x12000, scoped, tag = 'internal scratch']
  #allocation2 [shape = 'f32[128,1]{1,0:T(8,128)}', space=vmem, size = 0x10000, scoped, tag = 'scratch operand']
  #allocation3 [shape = 'f32[128,1]{1,0:T(8,128)}', space=vmem, size = 0x10000, scoped, tag = 'scratch operand']
  %s0 = inlined_call_operand.hbm [shape: f32[128,128], index: 0, kind: input, shape index: {}]
  %s1 = inlined_call_operand.hbm [shape: f32[128,128], index: 1, kind: input, shape index: {}]
  %s2 = inlined_call_operand.hbm [shape: f32[128,128], index: 2, kind: input, shape index: {}]
  %s3 = inlined_call_operand.hbm [shape: f32[128,128], index: 3, kind: input, shape index: {}]
  %s4 = inlined_call_operand.hbm [shape: f32[1,1], index: 4, kind: output, shape index: {}]
  %s5 = sld [smem:[#allocation0]]
  $region50: #{tpu_custom_call.1} parent=0
    _
  %s7 = ssub.s32 1, %s5
  %s8 = scalar_select 0, %s7, %s5
  $region1: #{tpu_custom_call.1} parent=0
    #allocation4 [shape = 'u8[65536]{0}', space=vmem, size = 0x10000, scoped, tag = 'input window, operand 0, single buffered']
    #allocation5 [shape = 's32[1]{0}', space=sflag, size = 0x4, scoped, tag = 'scoped memory for tpu_custom_call.1']
    #allocation6 [shape = 's32[1]{0}', space=sflag, size = 0x4, scoped, tag = 'scoped memory for tpu_custom_call.1']
    #allocation7 [shape = 'u8[65536]{0}', space=vmem, size = 0x10000, scoped, tag = 'input window, operand 1, single buffered']
    #allocation8 [shape = 's32[1]{0}', space=sflag, size = 0x4, scoped, tag = 'scoped memory for tpu_custom_call.1']
    #allocation9 [shape = 'u8[65536]{0}', space=vmem, size = 0x10000, scoped, tag = 'input window, operand 2, single buffered']
    #allocation10 [shape = 'u8[65536]{0}', space=vmem, size = 0x10000, scoped, tag = 'input window, operand 3, single buffered']
    #allocation11 [shape = 's32[1]{0}', space=sflag, size = 0x4, scoped, tag = 'scoped memory for tpu_custom_call.1']
    #allocation12 [shape = 'u8[512]{0}', space=smem, size = 0x200, scoped, tag = 'output window, operand 0, single buffered']
    %9 = vsyncpa [#allocation5], 0
    %10 = vsyncpa [#allocation8], 0
    %11 = vsyncpa [#allocation11], 0
    %12 = vsyncpa [#allocation6], 0
    // Predicated region
    $region2: #{tpu_custom_call.1} parent=1 // pred_check
      _
    $region3: #{tpu_custom_call.1} parent=1 // pred_check_branch
      %14 = sbr.rel (0) target = $region5
    $region4: #{tpu_custom_call.1} parent=1 // pred_region
      %s16 = ssub.s32 2048, 2048
      %17 = vsyncadd [#allocation5], %s16
      %s18 = sshll.u32 [#allocation4], 4
      %s19 = int_to_ptr.vmem [resolvable:$true] %s18
      %24 = dma.hbm_to_vmem [thread:$0]  %s0, 2048, %s19, [#allocation5], 128, 128, 8
    $region5: #{tpu_custom_call.1} parent=1 // pred_fallthru
      _
    // Predicated region
    $region6: #{tpu_custom_call.1} parent=1 // pred_check
      _
    $region7: #{tpu_custom_call.1} parent=1 // pred_check_branch
      %26 = sbr.rel (0) target = $region9
    $region8: #{tpu_custom_call.1} parent=1 // pred_region
      %s28 = ssub.s32 2048, 2048
      %29 = vsyncadd [#allocation8], %s28
      %s30 = sshll.u32 [#allocation7], 4
      %s31 = int_to_ptr.vmem [resolvable:$true] %s30
      %36 = dma.hbm_to_vmem [thread:$0]  %s1, 2048, %s31, [#allocation8], 128, 128, 8
    $region9: #{tpu_custom_call.1} parent=1 // pred_fallthru
      _
    // Predicated region
    $region10: #{tpu_custom_call.1} parent=1 // pred_check
      _
    $region11: #{tpu_custom_call.1} parent=1 // pred_check_branch
      %38 = sbr.rel (0) target = $region13
    $region12: #{tpu_custom_call.1} parent=1 // pred_region
      %s40 = ssub.s32 2048, 2048
      %41 = vsyncadd [#allocation8], %s40
      %s42 = sshll.u32 [#allocation9], 4
      %s43 = int_to_ptr.vmem [resolvable:$true] %s42
      %48 = dma.hbm_to_vmem [thread:$0]  %s2, 2048, %s43, [#allocation8], 128, 128, 8
    $region13: #{tpu_custom_call.1} parent=1 // pred_fallthru
      _
    // Predicated region
    $region14: #{tpu_custom_call.1} parent=1 // pred_check
      _
    $region15: #{tpu_custom_call.1} parent=1 // pred_check_branch
      %50 = sbr.rel (0) target = $region17
    $region16: #{tpu_custom_call.1} parent=1 // pred_region
      %s52 = ssub.s32 2048, 2048
      %53 = vsyncadd [#allocation11], %s52
      %s54 = sshll.u32 [#allocation10], 4
      %s55 = int_to_ptr.vmem [resolvable:$true] %s54
      %60 = dma.hbm_to_vmem [thread:$0]  %s3, 2048, %s55, [#allocation11], 128, 128, 8
    $region17: #{tpu_custom_call.1} parent=1 // pred_fallthru
      _
    // Predicated region
    $region18: #{tpu_custom_call.1} parent=1 // pred_check
      _
    $region19: #{tpu_custom_call.1} parent=1 // pred_check_branch
      %62 = sbr.rel (0) target = $region21
    $region20: #{tpu_custom_call.1} parent=1 // pred_region
      %63 = dma.done [#allocation5], 2048
    $region21: #{tpu_custom_call.1} parent=1 // pred_fallthru
      _
    // Predicated region
    $region22: #{tpu_custom_call.1} parent=1 // pred_check
      _
    $region23: #{tpu_custom_call.1} parent=1 // pred_check_branch
      %65 = sbr.rel (0) target = $region25
    $region24: #{tpu_custom_call.1} parent=1 // pred_region
      %66 = dma.done [#allocation8], 2048
    $region25: #{tpu_custom_call.1} parent=1 // pred_fallthru
      _
    // Predicated region
    $region26: #{tpu_custom_call.1} parent=1 // pred_check
      _
    $region27: #{tpu_custom_call.1} parent=1 // pred_check_branch
      %68 = sbr.rel (0) target = $region29
    $region28: #{tpu_custom_call.1} parent=1 // pred_region
      %69 = dma.done [#allocation8], 2048
    $region29: #{tpu_custom_call.1} parent=1 // pred_fallthru
      _
    // Predicated region
    $region30: #{tpu_custom_call.1} parent=1 // pred_check
      _
    $region31: #{tpu_custom_call.1} parent=1 // pred_check_branch
      %71 = sbr.rel (0) target = $region33
    $region32: #{tpu_custom_call.1} parent=1 // pred_region
      %72 = dma.done [#allocation11], 2048
    $region33: #{tpu_custom_call.1} parent=1 // pred_fallthru
      _
    %p73 = scmp.eq.s32.totalorder 0, 0
    // Predicated region
    $region34: #{tpu_custom_call.1} parent=1 // pred_check
      %p74 = pneg %p73
    $region35: #{tpu_custom_call.1} parent=1 // pred_check_branch
      %76 = sbr.rel (%p74) target = $region37
    $region36: #{tpu_custom_call.1} parent=1 // pred_region
      %vm77 = vcmask 7168
      %78 = vst.msk [vmem:[#allocation2] sm:$0xff] %vm77, 0.0
      %79 = vst.msk [vmem:[#allocation2 + $0x8] sm:$0xff] %vm77, 0.0
      %80 = vst.msk [vmem:[#allocation2 + $0x10] sm:$0xff] %vm77, 0.0
      %81 = vst.msk [vmem:[#allocation2 + $0x18] sm:$0xff] %vm77, 0.0
      %82 = vst.msk [vmem:[#allocation2 + $0x20] sm:$0xff] %vm77, 0.0
      %83 = vst.msk [vmem:[#allocation2 + $0x28] sm:$0xff] %vm77, 0.0
      %84 = vst.msk [vmem:[#allocation2 + $0x30] sm:$0xff] %vm77, 0.0
      %85 = vst.msk [vmem:[#allocation2 + $0x38] sm:$0xff] %vm77, 0.0
      %86 = vst.msk [vmem:[#allocation2 + $0x40] sm:$0xff] %vm77, 0.0
      %87 = vst.msk [vmem:[#allocation2 + $0x48] sm:$0xff] %vm77, 0.0
      %88 = vst.msk [vmem:[#allocation2 + $0x50] sm:$0xff] %vm77, 0.0
      %89 = vst.msk [vmem:[#allocation2 + $0x58] sm:$0xff] %vm77, 0.0
      %90 = vst.msk [vmem:[#allocation2 + $0x60] sm:$0xff] %vm77, 0.0
      %91 = vst.msk [vmem:[#allocation2 + $0x68] sm:$0xff] %vm77, 0.0
      %92 = vst.msk [vmem:[#allocation2 + $0x70] sm:$0xff] %vm77, 0.0
      %93 = vst.msk [vmem:[#allocation2 + $0x78] sm:$0xff] %vm77, 0.0
      %94 = vst.msk [vmem:[#allocation3] sm:$0xff] %vm77, 0.0
      %95 = vst.msk [vmem:[#allocation3 + $0x8] sm:$0xff] %vm77, 0.0
      %96 = vst.msk [vmem:[#allocation3 + $0x10] sm:$0xff] %vm77, 0.0
      %97 = vst.msk [vmem:[#allocation3 + $0x18] sm:$0xff] %vm77, 0.0
      %98 = vst.msk [vmem:[#allocation3 + $0x20] sm:$0xff] %vm77, 0.0
      %99 = vst.msk [vmem:[#allocation3 + $0x28] sm:$0xff] %vm77, 0.0
      %100 = vst.msk [vmem:[#allocation3 + $0x30] sm:$0xff] %vm77, 0.0
      %101 = vst.msk [vmem:[#allocation3 + $0x38] sm:$0xff] %vm77, 0.0
      %102 = vst.msk [vmem:[#allocation3 + $0x40] sm:$0xff] %vm77, 0.0
      %103 = vst.msk [vmem:[#allocation3 + $0x48] sm:$0xff] %vm77, 0.0
      %104 = vst.msk [vmem:[#allocation3 + $0x50] sm:$0xff] %vm77, 0.0
      %105 = vst.msk [vmem:[#allocation3 + $0x58] sm:$0xff] %vm77, 0.0
      %106 = vst.msk [vmem:[#allocation3 + $0x60] sm:$0xff] %vm77, 0.0
      %107 = vst.msk [vmem:[#allocation3 + $0x68] sm:$0xff] %vm77, 0.0
      %108 = vst.msk [vmem:[#allocation3 + $0x70] sm:$0xff] %vm77, 0.0
      %109 = vst.msk [vmem:[#allocation3 + $0x78] sm:$0xff] %vm77, 0.0
    $region37: #{tpu_custom_call.1} parent=1 // pred_fallthru
      _
    %v110 = vld [vmem:[#allocation2] sm:$0xff]
    %v111 = vld [vmem:[#allocation2 + $0x8] sm:$0xff]
    %v112 = vld [vmem:[#allocation2 + $0x10] sm:$0xff]
    %v113 = vld [vmem:[#allocation2 + $0x18] sm:$0xff]
    %v114 = vld [vmem:[#allocation2 + $0x20] sm:$0xff]
    %v115 = vld [vmem:[#allocation2 + $0x28] sm:$0xff]
    %v116 = vld [vmem:[#allocation2 + $0x30] sm:$0xff]
    %v117 = vld [vmem:[#allocation2 + $0x38] sm:$0xff]
    %v118 = vld [vmem:[#allocation2 + $0x40] sm:$0xff]
    %v119 = vld [vmem:[#allocation2 + $0x48] sm:$0xff]
    %v120 = vld [vmem:[#allocation2 + $0x50] sm:$0xff]
    %v121 = vld [vmem:[#allocation2 + $0x58] sm:$0xff]
    %v122 = vld [vmem:[#allocation2 + $0x60] sm:$0xff]
    %v123 = vld [vmem:[#allocation2 + $0x68] sm:$0xff]
    %v124 = vld [vmem:[#allocation2 + $0x70] sm:$0xff]
    %v125 = vld [vmem:[#allocation2 + $0x78] sm:$0xff]
    %v126 = vld [vmem:[#allocation4] sm:$0xff]
    %v127 = vld [vmem:[#allocation4 + $0x8] sm:$0xff]
    %v128 = vld [vmem:[#allocation4 + $0x10] sm:$0xff]
    %v129 = vld [vmem:[#allocation4 + $0x18] sm:$0xff]
    %v130 = vld [vmem:[#allocation4 + $0x20] sm:$0xff]
    %v131 = vld [vmem:[#allocation4 + $0x28] sm:$0xff]
    %v132 = vld [vmem:[#allocation4 + $0x30] sm:$0xff]
    %v133 = vld [vmem:[#allocation4 + $0x38] sm:$0xff]
    %v134 = vld [vmem:[#allocation4 + $0x40] sm:$0xff]
    %v135 = vld [vmem:[#allocation4 + $0x48] sm:$0xff]
    %v136 = vld [vmem:[#allocation4 + $0x50] sm:$0xff]
    %v137 = vld [vmem:[#allocation4 + $0x58] sm:$0xff]
    %v138 = vld [vmem:[#allocation4 + $0x60] sm:$0xff]
    %v139 = vld [vmem:[#allocation4 + $0x68] sm:$0xff]
    %v140 = vld [vmem:[#allocation4 + $0x70] sm:$0xff]
    %v141 = vld [vmem:[#allocation4 + $0x78] sm:$0xff]
    %v142 = vld [vmem:[#allocation7] sm:$0xff]
    %v143 = vld [vmem:[#allocation7 + $0x8] sm:$0xff]
    %v144 = vld [vmem:[#allocation7 + $0x10] sm:$0xff]
    %v145 = vld [vmem:[#allocation7 + $0x18] sm:$0xff]
    %v146 = vld [vmem:[#allocation7 + $0x20] sm:$0xff]
    %v147 = vld [vmem:[#allocation7 + $0x28] sm:$0xff]
    %v148 = vld [vmem:[#allocation7 + $0x30] sm:$0xff]
    %v149 = vld [vmem:[#allocation7 + $0x38] sm:$0xff]
    %v150 = vld [vmem:[#allocation7 + $0x40] sm:$0xff]
    %v151 = vld [vmem:[#allocation7 + $0x48] sm:$0xff]
    %v152 = vld [vmem:[#allocation7 + $0x50] sm:$0xff]
    %v153 = vld [vmem:[#allocation7 + $0x58] sm:$0xff]
    %v154 = vld [vmem:[#allocation7 + $0x60] sm:$0xff]
    %v155 = vld [vmem:[#allocation7 + $0x68] sm:$0xff]
    %v156 = vld [vmem:[#allocation7 + $0x70] sm:$0xff]
    %v157 = vld [vmem:[#allocation7 + $0x78] sm:$0xff]
    %v158 = vsub.f32 %v126, %v142
    %v159 = vsub.f32 %v127, %v143
    %v160 = vsub.f32 %v128, %v144
    %v161 = vsub.f32 %v129, %v145
    %v162 = vsub.f32 %v130, %v146
    %v163 = vsub.f32 %v131, %v147
    %v164 = vsub.f32 %v132, %v148
    %v165 = vsub.f32 %v133, %v149
    %v166 = vsub.f32 %v134, %v150
    %v167 = vsub.f32 %v135, %v151
    %v168 = vsub.f32 %v136, %v152
    %v169 = vsub.f32 %v137, %v153
    %v170 = vsub.f32 %v138, %v154
    %v171 = vsub.f32 %v139, %v155
    %v172 = vsub.f32 %v140, %v156
    %v173 = vsub.f32 %v141, %v157
    %v174 = vmul.f32 %v158, %v158
    %v175 = vmul.f32 %v159, %v159
    %v176 = vmul.f32 %v160, %v160
    %v177 = vmul.f32 %v161, %v161
    %v178 = vmul.f32 %v162, %v162
    %v179 = vmul.f32 %v163, %v163
    %v180 = vmul.f32 %v164, %v164
    %v181 = vmul.f32 %v165, %v165
    %v182 = vmul.f32 %v166, %v166
    %v183 = vmul.f32 %v167, %v167
    %v184 = vmul.f32 %v168, %v168
    %v185 = vmul.f32 %v169, %v169
    %v186 = vmul.f32 %v170, %v170
    %v187 = vmul.f32 %v171, %v171
    %v188 = vmul.f32 %v172, %v172
    %v189 = vmul.f32 %v173, %v173
    %190 = vadd.xlane.f32.xlu0 %v174
    %v191 = vpop.xlane.xlu0 %190
    %192 = vadd.xlane.f32.xlu0 %v175
    %v193 = vpop.xlane.xlu0 %192
    %194 = vadd.xlane.f32.xlu0 %v176
    %v195 = vpop.xlane.xlu0 %194
    %196 = vadd.xlane.f32.xlu0 %v177
    %v197 = vpop.xlane.xlu0 %196
    %198 = vadd.xlane.f32.xlu0 %v178
    %v199 = vpop.xlane.xlu0 %198
    %200 = vadd.xlane.f32.xlu0 %v179
    %v201 = vpop.xlane.xlu0 %200
    %202 = vadd.xlane.f32.xlu0 %v180
    %v203 = vpop.xlane.xlu0 %202
    %204 = vadd.xlane.f32.xlu0 %v181
    %v205 = vpop.xlane.xlu0 %204
    %206 = vadd.xlane.f32.xlu0 %v182
    %v207 = vpop.xlane.xlu0 %206
    %208 = vadd.xlane.f32.xlu0 %v183
    %v209 = vpop.xlane.xlu0 %208
    %210 = vadd.xlane.f32.xlu0 %v184
    %v211 = vpop.xlane.xlu0 %210
    %212 = vadd.xlane.f32.xlu0 %v185
    %v213 = vpop.xlane.xlu0 %212
    %214 = vadd.xlane.f32.xlu0 %v186
    %v215 = vpop.xlane.xlu0 %214
    %216 = vadd.xlane.f32.xlu0 %v187
    %v217 = vpop.xlane.xlu0 %216
    %218 = vadd.xlane.f32.xlu0 %v188
    %v219 = vpop.xlane.xlu0 %218
    %220 = vadd.xlane.f32.xlu0 %v189
    %v221 = vpop.xlane.xlu0 %220
    %v222 = vadd.f32 %v191, 1e-06
    %v223 = vadd.f32 %v193, 1e-06
    %v224 = vadd.f32 %v195, 1e-06
    %v225 = vadd.f32 %v197, 1e-06
    %v226 = vadd.f32 %v199, 1e-06
    %v227 = vadd.f32 %v201, 1e-06
    %v228 = vadd.f32 %v203, 1e-06
    %v229 = vadd.f32 %v205, 1e-06
    %v230 = vadd.f32 %v207, 1e-06
    %v231 = vadd.f32 %v209, 1e-06
    %v232 = vadd.f32 %v211, 1e-06
    %v233 = vadd.f32 %v213, 1e-06
    %v234 = vadd.f32 %v215, 1e-06
    %v235 = vadd.f32 %v217, 1e-06
    %v236 = vadd.f32 %v219, 1e-06
    %v237 = vadd.f32 %v221, 1e-06
    %v238 = vrsqrt.pop %v222
    %v239 = vmul.f32 %v222, %v238
    %vm240 = vcmp.eq.f32.partialorder %v222, inf
    %v241 = vsel %vm240, %v222, %v239
    %vm242 = vcmp.eq.f32.partialorder %v222, 0.0
    %v243 = vand.u32 %v222, 2147483648
    %v244 = vsel %vm242, %v243, %v241
    %v245 = vrsqrt.pop %v223
    %v246 = vmul.f32 %v223, %v245
    %vm247 = vcmp.eq.f32.partialorder %v223, inf
    %v248 = vsel %vm247, %v223, %v246
    %vm249 = vcmp.eq.f32.partialorder %v223, 0.0
    %v250 = vand.u32 %v223, 2147483648
    %v251 = vsel %vm249, %v250, %v248
    %v252 = vrsqrt.pop %v224
    %v253 = vmul.f32 %v224, %v252
    %vm254 = vcmp.eq.f32.partialorder %v224, inf
    %v255 = vsel %vm254, %v224, %v253
    %vm256 = vcmp.eq.f32.partialorder %v224, 0.0
    %v257 = vand.u32 %v224, 2147483648
    %v258 = vsel %vm256, %v257, %v255
    %v259 = vrsqrt.pop %v225
    %v260 = vmul.f32 %v225, %v259
    %vm261 = vcmp.eq.f32.partialorder %v225, inf
    %v262 = vsel %vm261, %v225, %v260
    %vm263 = vcmp.eq.f32.partialorder %v225, 0.0
    %v264 = vand.u32 %v225, 2147483648
    %v265 = vsel %vm263, %v264, %v262
    %v266 = vrsqrt.pop %v226
    %v267 = vmul.f32 %v226, %v266
    %vm268 = vcmp.eq.f32.partialorder %v226, inf
    %v269 = vsel %vm268, %v226, %v267
    %vm270 = vcmp.eq.f32.partialorder %v226, 0.0
    %v271 = vand.u32 %v226, 2147483648
    %v272 = vsel %vm270, %v271, %v269
    %v273 = vrsqrt.pop %v227
    %v274 = vmul.f32 %v227, %v273
    %vm275 = vcmp.eq.f32.partialorder %v227, inf
    %v276 = vsel %vm275, %v227, %v274
    %vm277 = vcmp.eq.f32.partialorder %v227, 0.0
    %v278 = vand.u32 %v227, 2147483648
    %v279 = vsel %vm277, %v278, %v276
    %v280 = vrsqrt.pop %v228
    %v281 = vmul.f32 %v228, %v280
    %vm282 = vcmp.eq.f32.partialorder %v228, inf
    %v283 = vsel %vm282, %v228, %v281
    %vm284 = vcmp.eq.f32.partialorder %v228, 0.0
    %v285 = vand.u32 %v228, 2147483648
    %v286 = vsel %vm284, %v285, %v283
    %v287 = vrsqrt.pop %v229
    %v288 = vmul.f32 %v229, %v287
    %vm289 = vcmp.eq.f32.partialorder %v229, inf
    %v290 = vsel %vm289, %v229, %v288
    %vm291 = vcmp.eq.f32.partialorder %v229, 0.0
    %v292 = vand.u32 %v229, 2147483648
    %v293 = vsel %vm291, %v292, %v290
    %v294 = vrsqrt.pop %v230
    %v295 = vmul.f32 %v230, %v294
    %vm296 = vcmp.eq.f32.partialorder %v230, inf
    %v297 = vsel %vm296, %v230, %v295
    %vm298 = vcmp.eq.f32.partialorder %v230, 0.0
    %v299 = vand.u32 %v230, 2147483648
    %v300 = vsel %vm298, %v299, %v297
    %v301 = vrsqrt.pop %v231
    %v302 = vmul.f32 %v231, %v301
    %vm303 = vcmp.eq.f32.partialorder %v231, inf
    %v304 = vsel %vm303, %v231, %v302
    %vm305 = vcmp.eq.f32.partialorder %v231, 0.0
    %v306 = vand.u32 %v231, 2147483648
    %v307 = vsel %vm305, %v306, %v304
    %v308 = vrsqrt.pop %v232
    %v309 = vmul.f32 %v232, %v308
    %vm310 = vcmp.eq.f32.partialorder %v232, inf
    %v311 = vsel %vm310, %v232, %v309
    %vm312 = vcmp.eq.f32.partialorder %v232, 0.0
    %v313 = vand.u32 %v232, 2147483648
    %v314 = vsel %vm312, %v313, %v311
    %v315 = vrsqrt.pop %v233
    %v316 = vmul.f32 %v233, %v315
    %vm317 = vcmp.eq.f32.partialorder %v233, inf
    %v318 = vsel %vm317, %v233, %v316
    %vm319 = vcmp.eq.f32.partialorder %v233, 0.0
    %v320 = vand.u32 %v233, 2147483648
    %v321 = vsel %vm319, %v320, %v318
    %v322 = vrsqrt.pop %v234
    %v323 = vmul.f32 %v234, %v322
    %vm324 = vcmp.eq.f32.partialorder %v234, inf
    %v325 = vsel %vm324, %v234, %v323
    %vm326 = vcmp.eq.f32.partialorder %v234, 0.0
    %v327 = vand.u32 %v234, 2147483648
    %v328 = vsel %vm326, %v327, %v325
    %v329 = vrsqrt.pop %v235
    %v330 = vmul.f32 %v235, %v329
    %vm331 = vcmp.eq.f32.partialorder %v235, inf
    %v332 = vsel %vm331, %v235, %v330
    %vm333 = vcmp.eq.f32.partialorder %v235, 0.0
    %v334 = vand.u32 %v235, 2147483648
    %v335 = vsel %vm333, %v334, %v332
    %v336 = vrsqrt.pop %v236
    %v337 = vmul.f32 %v236, %v336
    %vm338 = vcmp.eq.f32.partialorder %v236, inf
    %v339 = vsel %vm338, %v236, %v337
    %vm340 = vcmp.eq.f32.partialorder %v236, 0.0
    %v341 = vand.u32 %v236, 2147483648
    %v342 = vsel %vm340, %v341, %v339
    %v343 = vrsqrt.pop %v237
    %v344 = vmul.f32 %v237, %v343
    %vm345 = vcmp.eq.f32.partialorder %v237, inf
    %v346 = vsel %vm345, %v237, %v344
    %vm347 = vcmp.eq.f32.partialorder %v237, 0.0
    %v348 = vand.u32 %v237, 2147483648
    %v349 = vsel %vm347, %v348, %v346
    %v350 = vadd.f32 %v110, %v244
    %v351 = vadd.f32 %v111, %v251
    %v352 = vadd.f32 %v112, %v258
    %v353 = vadd.f32 %v113, %v265
    %v354 = vadd.f32 %v114, %v272
    %v355 = vadd.f32 %v115, %v279
    %v356 = vadd.f32 %v116, %v286
    %v357 = vadd.f32 %v117, %v293
    %v358 = vadd.f32 %v118, %v300
    %v359 = vadd.f32 %v119, %v307
    %v360 = vadd.f32 %v120, %v314
    %v361 = vadd.f32 %v121, %v321
    %v362 = vadd.f32 %v122, %v328
    %v363 = vadd.f32 %v123, %v335
    %v364 = vadd.f32 %v124, %v342
    %v365 = vadd.f32 %v125, %v349
    %vm366 = vcmask 7168
    %367 = vst.msk [vmem:[#allocation2] sm:$0xff] %vm366, %v350
    %368 = vst.msk [vmem:[#allocation2 + $0x8] sm:$0xff] %vm366, %v351
    %369 = vst.msk [vmem:[#allocation2 + $0x10] sm:$0xff] %vm366, %v352
    %370 = vst.msk [vmem:[#allocation2 + $0x18] sm:$0xff] %vm366, %v353
    %371 = vst.msk [vmem:[#allocation2 + $0x20] sm:$0xff] %vm366, %v354
    %372 = vst.msk [vmem:[#allocation2 + $0x28] sm:$0xff] %vm366, %v355
    %373 = vst.msk [vmem:[#allocation2 + $0x30] sm:$0xff] %vm366, %v356
    %374 = vst.msk [vmem:[#allocation2 + $0x38] sm:$0xff] %vm366, %v357
    %375 = vst.msk [vmem:[#allocation2 + $0x40] sm:$0xff] %vm366, %v358
    %376 = vst.msk [vmem:[#allocation2 + $0x48] sm:$0xff] %vm366, %v359
    %377 = vst.msk [vmem:[#allocation2 + $0x50] sm:$0xff] %vm366, %v360
    %378 = vst.msk [vmem:[#allocation2 + $0x58] sm:$0xff] %vm366, %v361
    %379 = vst.msk [vmem:[#allocation2 + $0x60] sm:$0xff] %vm366, %v362
    %380 = vst.msk [vmem:[#allocation2 + $0x68] sm:$0xff] %vm366, %v363
    %381 = vst.msk [vmem:[#allocation2 + $0x70] sm:$0xff] %vm366, %v364
    %382 = vst.msk [vmem:[#allocation2 + $0x78] sm:$0xff] %vm366, %v365
    %v383 = vld [vmem:[#allocation3] sm:$0xff]
    %v384 = vld [vmem:[#allocation3 + $0x8] sm:$0xff]
    %v385 = vld [vmem:[#allocation3 + $0x10] sm:$0xff]
    %v386 = vld [vmem:[#allocation3 + $0x18] sm:$0xff]
    %v387 = vld [vmem:[#allocation3 + $0x20] sm:$0xff]
    %v388 = vld [vmem:[#allocation3 + $0x28] sm:$0xff]
    %v389 = vld [vmem:[#allocation3 + $0x30] sm:$0xff]
    %v390 = vld [vmem:[#allocation3 + $0x38] sm:$0xff]
    %v391 = vld [vmem:[#allocation3 + $0x40] sm:$0xff]
    %v392 = vld [vmem:[#allocation3 + $0x48] sm:$0xff]
    %v393 = vld [vmem:[#allocation3 + $0x50] sm:$0xff]
    %v394 = vld [vmem:[#allocation3 + $0x58] sm:$0xff]
    %v395 = vld [vmem:[#allocation3 + $0x60] sm:$0xff]
    %v396 = vld [vmem:[#allocation3 + $0x68] sm:$0xff]
    %v397 = vld [vmem:[#allocation3 + $0x70] sm:$0xff]
    %v398 = vld [vmem:[#allocation3 + $0x78] sm:$0xff]
    %v399 = vld [vmem:[#allocation9] sm:$0xff]
    %v400 = vld [vmem:[#allocation9 + $0x8] sm:$0xff]
    %v401 = vld [vmem:[#allocation9 + $0x10] sm:$0xff]
    %v402 = vld [vmem:[#allocation9 + $0x18] sm:$0xff]
    %v403 = vld [vmem:[#allocation9 + $0x20] sm:$0xff]
    %v404 = vld [vmem:[#allocation9 + $0x28] sm:$0xff]
    %v405 = vld [vmem:[#allocation9 + $0x30] sm:$0xff]
    %v406 = vld [vmem:[#allocation9 + $0x38] sm:$0xff]
    %v407 = vld [vmem:[#allocation9 + $0x40] sm:$0xff]
    %v408 = vld [vmem:[#allocation9 + $0x48] sm:$0xff]
    %v409 = vld [vmem:[#allocation9 + $0x50] sm:$0xff]
    %v410 = vld [vmem:[#allocation9 + $0x58] sm:$0xff]
    %v411 = vld [vmem:[#allocation9 + $0x60] sm:$0xff]
    %v412 = vld [vmem:[#allocation9 + $0x68] sm:$0xff]
    %v413 = vld [vmem:[#allocation9 + $0x70] sm:$0xff]
    %v414 = vld [vmem:[#allocation9 + $0x78] sm:$0xff]
    %v415 = vld [vmem:[#allocation10] sm:$0xff]
    %v416 = vld [vmem:[#allocation10 + $0x8] sm:$0xff]
    %v417 = vld [vmem:[#allocation10 + $0x10] sm:$0xff]
    %v418 = vld [vmem:[#allocation10 + $0x18] sm:$0xff]
    %v419 = vld [vmem:[#allocation10 + $0x20] sm:$0xff]
    %v420 = vld [vmem:[#allocation10 + $0x28] sm:$0xff]
    %v421 = vld [vmem:[#allocation10 + $0x30] sm:$0xff]
    %v422 = vld [vmem:[#allocation10 + $0x38] sm:$0xff]
    %v423 = vld [vmem:[#allocation10 + $0x40] sm:$0xff]
    %v424 = vld [vmem:[#allocation10 + $0x48] sm:$0xff]
    %v425 = vld [vmem:[#allocation10 + $0x50] sm:$0xff]
    %v426 = vld [vmem:[#allocation10 + $0x58] sm:$0xff]
    %v427 = vld [vmem:[#allocation10 + $0x60] sm:$0xff]
    %v428 = vld [vmem:[#allocation10 + $0x68] sm:$0xff]
    %v429 = vld [vmem:[#allocation10 + $0x70] sm:$0xff]
    %v430 = vld [vmem:[#allocation10 + $0x78] sm:$0xff]
    %v431 = vsub.f32 %v399, %v415
    %v432 = vsub.f32 %v400, %v416
    %v433 = vsub.f32 %v401, %v417
    %v434 = vsub.f32 %v402, %v418
    %v435 = vsub.f32 %v403, %v419
    %v436 = vsub.f32 %v404, %v420
    %v437 = vsub.f32 %v405, %v421
    %v438 = vsub.f32 %v406, %v422
    %v439 = vsub.f32 %v407, %v423
    %v440 = vsub.f32 %v408, %v424
    %v441 = vsub.f32 %v409, %v425
    %v442 = vsub.f32 %v410, %v426
    %v443 = vsub.f32 %v411, %v427
    %v444 = vsub.f32 %v412, %v428
    %v445 = vsub.f32 %v413, %v429
    %v446 = vsub.f32 %v414, %v430
    %v447 = vmul.f32 %v431, %v431
    %v448 = vmul.f32 %v432, %v432
    %v449 = vmul.f32 %v433, %v433
    %v450 = vmul.f32 %v434, %v434
    %v451 = vmul.f32 %v435, %v435
    %v452 = vmul.f32 %v436, %v436
    %v453 = vmul.f32 %v437, %v437
    %v454 = vmul.f32 %v438, %v438
    %v455 = vmul.f32 %v439, %v439
    %v456 = vmul.f32 %v440, %v440
    %v457 = vmul.f32 %v441, %v441
    %v458 = vmul.f32 %v442, %v442
    %v459 = vmul.f32 %v443, %v443
    %v460 = vmul.f32 %v444, %v444
    %v461 = vmul.f32 %v445, %v445
    %v462 = vmul.f32 %v446, %v446
    %463 = vadd.xlane.f32.xlu0 %v447
    %v464 = vpop.xlane.xlu0 %463
    %465 = vadd.xlane.f32.xlu0 %v448
    %v466 = vpop.xlane.xlu0 %465
    %467 = vadd.xlane.f32.xlu0 %v449
    %v468 = vpop.xlane.xlu0 %467
    %469 = vadd.xlane.f32.xlu0 %v450
    %v470 = vpop.xlane.xlu0 %469
    %471 = vadd.xlane.f32.xlu0 %v451
    %v472 = vpop.xlane.xlu0 %471
    %473 = vadd.xlane.f32.xlu0 %v452
    %v474 = vpop.xlane.xlu0 %473
    %475 = vadd.xlane.f32.xlu0 %v453
    %v476 = vpop.xlane.xlu0 %475
    %477 = vadd.xlane.f32.xlu0 %v454
    %v478 = vpop.xlane.xlu0 %477
    %479 = vadd.xlane.f32.xlu0 %v455
    %v480 = vpop.xlane.xlu0 %479
    %481 = vadd.xlane.f32.xlu0 %v456
    %v482 = vpop.xlane.xlu0 %481
    %483 = vadd.xlane.f32.xlu0 %v457
    %v484 = vpop.xlane.xlu0 %483
    %485 = vadd.xlane.f32.xlu0 %v458
    %v486 = vpop.xlane.xlu0 %485
    %487 = vadd.xlane.f32.xlu0 %v459
    %v488 = vpop.xlane.xlu0 %487
    %489 = vadd.xlane.f32.xlu0 %v460
    %v490 = vpop.xlane.xlu0 %489
    %491 = vadd.xlane.f32.xlu0 %v461
    %v492 = vpop.xlane.xlu0 %491
    %493 = vadd.xlane.f32.xlu0 %v462
    %v494 = vpop.xlane.xlu0 %493
    %v495 = vadd.f32 %v464, 1e-06
    %v496 = vadd.f32 %v466, 1e-06
    %v497 = vadd.f32 %v468, 1e-06
    %v498 = vadd.f32 %v470, 1e-06
    %v499 = vadd.f32 %v472, 1e-06
    %v500 = vadd.f32 %v474, 1e-06
    %v501 = vadd.f32 %v476, 1e-06
    %v502 = vadd.f32 %v478, 1e-06
    %v503 = vadd.f32 %v480, 1e-06
    %v504 = vadd.f32 %v482, 1e-06
    %v505 = vadd.f32 %v484, 1e-06
    %v506 = vadd.f32 %v486, 1e-06
    %v507 = vadd.f32 %v488, 1e-06
    %v508 = vadd.f32 %v490, 1e-06
    %v509 = vadd.f32 %v492, 1e-06
    %v510 = vadd.f32 %v494, 1e-06
    %v511 = vrsqrt.pop %v495
    %v512 = vmul.f32 %v495, %v511
    %vm513 = vcmp.eq.f32.partialorder %v495, inf
    %v514 = vsel %vm513, %v495, %v512
    %vm515 = vcmp.eq.f32.partialorder %v495, 0.0
    %v516 = vand.u32 %v495, 2147483648
    %v517 = vsel %vm515, %v516, %v514
    %v518 = vrsqrt.pop %v496
    %v519 = vmul.f32 %v496, %v518
    %vm520 = vcmp.eq.f32.partialorder %v496, inf
    %v521 = vsel %vm520, %v496, %v519
    %vm522 = vcmp.eq.f32.partialorder %v496, 0.0
    %v523 = vand.u32 %v496, 2147483648
    %v524 = vsel %vm522, %v523, %v521
    %v525 = vrsqrt.pop %v497
    %v526 = vmul.f32 %v497, %v525
    %vm527 = vcmp.eq.f32.partialorder %v497, inf
    %v528 = vsel %vm527, %v497, %v526
    %vm529 = vcmp.eq.f32.partialorder %v497, 0.0
    %v530 = vand.u32 %v497, 2147483648
    %v531 = vsel %vm529, %v530, %v528
    %v532 = vrsqrt.pop %v498
    %v533 = vmul.f32 %v498, %v532
    %vm534 = vcmp.eq.f32.partialorder %v498, inf
    %v535 = vsel %vm534, %v498, %v533
    %vm536 = vcmp.eq.f32.partialorder %v498, 0.0
    %v537 = vand.u32 %v498, 2147483648
    %v538 = vsel %vm536, %v537, %v535
    %v539 = vrsqrt.pop %v499
    %v540 = vmul.f32 %v499, %v539
    %vm541 = vcmp.eq.f32.partialorder %v499, inf
    %v542 = vsel %vm541, %v499, %v540
    %vm543 = vcmp.eq.f32.partialorder %v499, 0.0
    %v544 = vand.u32 %v499, 2147483648
    %v545 = vsel %vm543, %v544, %v542
    %v546 = vrsqrt.pop %v500
    %v547 = vmul.f32 %v500, %v546
    %vm548 = vcmp.eq.f32.partialorder %v500, inf
    %v549 = vsel %vm548, %v500, %v547
    %vm550 = vcmp.eq.f32.partialorder %v500, 0.0
    %v551 = vand.u32 %v500, 2147483648
    %v552 = vsel %vm550, %v551, %v549
    %v553 = vrsqrt.pop %v501
    %v554 = vmul.f32 %v501, %v553
    %vm555 = vcmp.eq.f32.partialorder %v501, inf
    %v556 = vsel %vm555, %v501, %v554
    %vm557 = vcmp.eq.f32.partialorder %v501, 0.0
    %v558 = vand.u32 %v501, 2147483648
    %v559 = vsel %vm557, %v558, %v556
    %v560 = vrsqrt.pop %v502
    %v561 = vmul.f32 %v502, %v560
    %vm562 = vcmp.eq.f32.partialorder %v502, inf
    %v563 = vsel %vm562, %v502, %v561
    %vm564 = vcmp.eq.f32.partialorder %v502, 0.0
    %v565 = vand.u32 %v502, 2147483648
    %v566 = vsel %vm564, %v565, %v563
    %v567 = vrsqrt.pop %v503
    %v568 = vmul.f32 %v503, %v567
    %vm569 = vcmp.eq.f32.partialorder %v503, inf
    %v570 = vsel %vm569, %v503, %v568
    %vm571 = vcmp.eq.f32.partialorder %v503, 0.0
    %v572 = vand.u32 %v503, 2147483648
    %v573 = vsel %vm571, %v572, %v570
    %v574 = vrsqrt.pop %v504
    %v575 = vmul.f32 %v504, %v574
    %vm576 = vcmp.eq.f32.partialorder %v504, inf
    %v577 = vsel %vm576, %v504, %v575
    %vm578 = vcmp.eq.f32.partialorder %v504, 0.0
    %v579 = vand.u32 %v504, 2147483648
    %v580 = vsel %vm578, %v579, %v577
    %v581 = vrsqrt.pop %v505
    %v582 = vmul.f32 %v505, %v581
    %vm583 = vcmp.eq.f32.partialorder %v505, inf
    %v584 = vsel %vm583, %v505, %v582
    %vm585 = vcmp.eq.f32.partialorder %v505, 0.0
    %v586 = vand.u32 %v505, 2147483648
    %v587 = vsel %vm585, %v586, %v584
    %v588 = vrsqrt.pop %v506
    %v589 = vmul.f32 %v506, %v588
    %vm590 = vcmp.eq.f32.partialorder %v506, inf
    %v591 = vsel %vm590, %v506, %v589
    %vm592 = vcmp.eq.f32.partialorder %v506, 0.0
    %v593 = vand.u32 %v506, 2147483648
    %v594 = vsel %vm592, %v593, %v591
    %v595 = vrsqrt.pop %v507
    %v596 = vmul.f32 %v507, %v595
    %vm597 = vcmp.eq.f32.partialorder %v507, inf
    %v598 = vsel %vm597, %v507, %v596
    %vm599 = vcmp.eq.f32.partialorder %v507, 0.0
    %v600 = vand.u32 %v507, 2147483648
    %v601 = vsel %vm599, %v600, %v598
    %v602 = vrsqrt.pop %v508
    %v603 = vmul.f32 %v508, %v602
    %vm604 = vcmp.eq.f32.partialorder %v508, inf
    %v605 = vsel %vm604, %v508, %v603
    %vm606 = vcmp.eq.f32.partialorder %v508, 0.0
    %v607 = vand.u32 %v508, 2147483648
    %v608 = vsel %vm606, %v607, %v605
    %v609 = vrsqrt.pop %v509
    %v610 = vmul.f32 %v509, %v609
    %vm611 = vcmp.eq.f32.partialorder %v509, inf
    %v612 = vsel %vm611, %v509, %v610
    %vm613 = vcmp.eq.f32.partialorder %v509, 0.0
    %v614 = vand.u32 %v509, 2147483648
    %v615 = vsel %vm613, %v614, %v612
    %v616 = vrsqrt.pop %v510
    %v617 = vmul.f32 %v510, %v616
    %vm618 = vcmp.eq.f32.partialorder %v510, inf
    %v619 = vsel %vm618, %v510, %v617
    %vm620 = vcmp.eq.f32.partialorder %v510, 0.0
    %v621 = vand.u32 %v510, 2147483648
    %v622 = vsel %vm620, %v621, %v619
    %v623 = vadd.f32 %v383, %v517
    %v624 = vadd.f32 %v384, %v524
    %v625 = vadd.f32 %v385, %v531
    %v626 = vadd.f32 %v386, %v538
    %v627 = vadd.f32 %v387, %v545
    %v628 = vadd.f32 %v388, %v552
    %v629 = vadd.f32 %v389, %v559
    %v630 = vadd.f32 %v390, %v566
    %v631 = vadd.f32 %v391, %v573
    %v632 = vadd.f32 %v392, %v580
    %v633 = vadd.f32 %v393, %v587
    %v634 = vadd.f32 %v394, %v594
    %v635 = vadd.f32 %v395, %v601
    %v636 = vadd.f32 %v396, %v608
    %v637 = vadd.f32 %v397, %v615
    %v638 = vadd.f32 %v398, %v622
    %639 = vst.msk [vmem:[#allocation3] sm:$0xff] %vm366, %v623
    %640 = vst.msk [vmem:[#allocation3 + $0x8] sm:$0xff] %vm366, %v624
    %641 = vst.msk [vmem:[#allocation3 + $0x10] sm:$0xff] %vm366, %v625
    %642 = vst.msk [vmem:[#allocation3 + $0x18] sm:$0xff] %vm366, %v626
    %643 = vst.msk [vmem:[#allocation3 + $0x20] sm:$0xff] %vm366, %v627
    %644 = vst.msk [vmem:[#allocation3 + $0x28] sm:$0xff] %vm366, %v628
    %645 = vst.msk [vmem:[#allocation3 + $0x30] sm:$0xff] %vm366, %v629
    %646 = vst.msk [vmem:[#allocation3 + $0x38] sm:$0xff] %vm366, %v630
    %647 = vst.msk [vmem:[#allocation3 + $0x40] sm:$0xff] %vm366, %v631
    %648 = vst.msk [vmem:[#allocation3 + $0x48] sm:$0xff] %vm366, %v632
    %649 = vst.msk [vmem:[#allocation3 + $0x50] sm:$0xff] %vm366, %v633
    %650 = vst.msk [vmem:[#allocation3 + $0x58] sm:$0xff] %vm366, %v634
    %651 = vst.msk [vmem:[#allocation3 + $0x60] sm:$0xff] %vm366, %v635
    %652 = vst.msk [vmem:[#allocation3 + $0x68] sm:$0xff] %vm366, %v636
    %653 = vst.msk [vmem:[#allocation3 + $0x70] sm:$0xff] %vm366, %v637
    %654 = vst.msk [vmem:[#allocation3 + $0x78] sm:$0xff] %vm366, %v638
    // Predicated region
    $region38: #{tpu_custom_call.1} parent=1 // pred_check
      %p655 = pneg %p73
    $region39: #{tpu_custom_call.1} parent=1 // pred_check_branch
      %657 = sbr.rel (%p655) target = $region41
    $region40: #{tpu_custom_call.1} parent=1 // pred_region
      %v658 = vld [vmem:[#allocation2] sm:$0xff]
      %v659 = vld [vmem:[#allocation2 + $0x8] sm:$0xff]
      %v660 = vld [vmem:[#allocation2 + $0x10] sm:$0xff]
      %v661 = vld [vmem:[#allocation2 + $0x18] sm:$0xff]
      %v662 = vld [vmem:[#allocation2 + $0x20] sm:$0xff]
      %v663 = vld [vmem:[#allocation2 + $0x28] sm:$0xff]
      %v664 = vld [vmem:[#allocation2 + $0x30] sm:$0xff]
      %v665 = vld [vmem:[#allocation2 + $0x38] sm:$0xff]
      %v666 = vld [vmem:[#allocation2 + $0x40] sm:$0xff]
      %v667 = vld [vmem:[#allocation2 + $0x48] sm:$0xff]
      %v668 = vld [vmem:[#allocation2 + $0x50] sm:$0xff]
      %v669 = vld [vmem:[#allocation2 + $0x58] sm:$0xff]
      %v670 = vld [vmem:[#allocation2 + $0x60] sm:$0xff]
      %v671 = vld [vmem:[#allocation2 + $0x68] sm:$0xff]
      %v672 = vld [vmem:[#allocation2 + $0x70] sm:$0xff]
      %v673 = vld [vmem:[#allocation2 + $0x78] sm:$0xff]
      %v674 = vsel %vm366, %v658, 0.0
      %v675 = vsel %vm366, %v659, 0.0
      %v676 = vadd.f32 %v674, %v675
      %v677 = vsel %vm366, %v660, 0.0
      %v678 = vadd.f32 %v676, %v677
      %v679 = vsel %vm366, %v661, 0.0
      %v680 = vadd.f32 %v678, %v679
      %v681 = vsel %vm366, %v662, 0.0
      %v682 = vadd.f32 %v680, %v681
      %v683 = vsel %vm366, %v663, 0.0
      %v684 = vadd.f32 %v682, %v683
      %v685 = vsel %vm366, %v664, 0.0
      %v686 = vadd.f32 %v684, %v685
      %v687 = vsel %vm366, %v665, 0.0
      %v688 = vadd.f32 %v686, %v687
      %v689 = vsel %vm366, %v666, 0.0
      %v690 = vadd.f32 %v688, %v689
      %v691 = vsel %vm366, %v667, 0.0
      %v692 = vadd.f32 %v690, %v691
      %v693 = vsel %vm366, %v668, 0.0
      %v694 = vadd.f32 %v692, %v693
      %v695 = vsel %vm366, %v669, 0.0
      %v696 = vadd.f32 %v694, %v695
      %v697 = vsel %vm366, %v670, 0.0
      %v698 = vadd.f32 %v696, %v697
      %v699 = vsel %vm366, %v671, 0.0
      %v700 = vadd.f32 %v698, %v699
      %v701 = vsel %vm366, %v672, 0.0
      %v702 = vadd.f32 %v700, %v701
      %v703 = vsel %vm366, %v673, 0.0
      %v704 = vadd.f32 %v702, %v703
      %705 = vadd.xlane.f32.xlu0 %v704
      %v706 = vpop.xlane.xlu0 %705
      %v707 = vrot.slane %v706, 4
      %v708 = vadd.f32 %v706, %v707
      %v709 = vrot.slane %v708, 2
      %v710 = vadd.f32 %v708, %v709
      %v711 = vrot.slane %v710, 1
      %v712 = vadd.f32 %v710, %v711
      %s713 = vtos %v712
      %v714 = vld [vmem:[#allocation3] sm:$0xff]
      %v715 = vld [vmem:[#allocation3 + $0x8] sm:$0xff]
      %v716 = vld [vmem:[#allocation3 + $0x10] sm:$0xff]
      %v717 = vld [vmem:[#allocation3 + $0x18] sm:$0xff]
      %v718 = vld [vmem:[#allocation3 + $0x20] sm:$0xff]
      %v719 = vld [vmem:[#allocation3 + $0x28] sm:$0xff]
      %v720 = vld [vmem:[#allocation3 + $0x30] sm:$0xff]
      %v721 = vld [vmem:[#allocation3 + $0x38] sm:$0xff]
      %v722 = vld [vmem:[#allocation3 + $0x40] sm:$0xff]
      %v723 = vld [vmem:[#allocation3 + $0x48] sm:$0xff]
      %v724 = vld [vmem:[#allocation3 + $0x50] sm:$0xff]
      %v725 = vld [vmem:[#allocation3 + $0x58] sm:$0xff]
      %v726 = vld [vmem:[#allocation3 + $0x60] sm:$0xff]
      %v727 = vld [vmem:[#allocation3 + $0x68] sm:$0xff]
      %v728 = vld [vmem:[#allocation3 + $0x70] sm:$0xff]
      %v729 = vld [vmem:[#allocation3 + $0x78] sm:$0xff]
      %v730 = vsel %vm366, %v714, 0.0
      %v731 = vsel %vm366, %v715, 0.0
      %v732 = vadd.f32 %v730, %v731
      %v733 = vsel %vm366, %v716, 0.0
      %v734 = vadd.f32 %v732, %v733
      %v735 = vsel %vm366, %v717, 0.0
      %v736 = vadd.f32 %v734, %v735
      %v737 = vsel %vm366, %v718, 0.0
      %v738 = vadd.f32 %v736, %v737
      %v739 = vsel %vm366, %v719, 0.0
      %v740 = vadd.f32 %v738, %v739
      %v741 = vsel %vm366, %v720, 0.0
      %v742 = vadd.f32 %v740, %v741
      %v743 = vsel %vm366, %v721, 0.0
      %v744 = vadd.f32 %v742, %v743
      %v745 = vsel %vm366, %v722, 0.0
      %v746 = vadd.f32 %v744, %v745
      %v747 = vsel %vm366, %v723, 0.0
      %v748 = vadd.f32 %v746, %v747
      %v749 = vsel %vm366, %v724, 0.0
      %v750 = vadd.f32 %v748, %v749
      %v751 = vsel %vm366, %v725, 0.0
      %v752 = vadd.f32 %v750, %v751
      %v753 = vsel %vm366, %v726, 0.0
      %v754 = vadd.f32 %v752, %v753
      %v755 = vsel %vm366, %v727, 0.0
      %v756 = vadd.f32 %v754, %v755
      %v757 = vsel %vm366, %v728, 0.0
      %v758 = vadd.f32 %v756, %v757
      %v759 = vsel %vm366, %v729, 0.0
      %v760 = vadd.f32 %v758, %v759
      %761 = vadd.xlane.f32.xlu0 %v760
      %v762 = vpop.xlane.xlu0 %761
      %v763 = vrot.slane %v762, 4
      %v764 = vadd.f32 %v762, %v763
      %v765 = vrot.slane %v764, 2
      %v766 = vadd.f32 %v764, %v765
      %v767 = vrot.slane %v766, 1
      %v768 = vadd.f32 %v766, %v767
      %s769 = vtos %v768
      %s770 = sadd.f32 %s713, %s769
      %s771 = smul.f32 %s770, 0.00390625
      %s772 = scalar_lea.smem [#allocation12], 0
      %773 = sst [smem:[%s772]] %s771
    $region41: #{tpu_custom_call.1} parent=1 // pred_fallthru
      _
    // Predicated region
    $region42: #{tpu_custom_call.1} parent=1 // pred_check
      _
    $region43: #{tpu_custom_call.1} parent=1 // pred_check_branch
      %775 = sbr.rel (0) target = $region45
    $region44: #{tpu_custom_call.1} parent=1 // pred_region
      %s777 = ssub.s32 16, 16
      %778 = vsyncadd [#allocation6], %s777
      %781 = dma.smem_to_hbm [#allocation12], 16, %s4, [#allocation6]
    $region45: #{tpu_custom_call.1} parent=1 // pred_fallthru
      _
    // Predicated region
    $region46: #{tpu_custom_call.1} parent=1 // pred_check
      _
    $region47: #{tpu_custom_call.1} parent=1 // pred_check_branch
      %783 = sbr.rel (0) target = $region49
    $region48: #{tpu_custom_call.1} parent=1 // pred_region
      %784 = dma.done [#allocation6], 16
    $region49: #{tpu_custom_call.1} parent=1 // pred_fallthru
      _
    %785 = sfence
    %786 = vsyncpa [#allocation5], 1
    %787 = vsyncpa [#allocation8], 1
    %788 = vsyncpa [#allocation11], 1
    %789 = vsyncpa [#allocation6], 1

</llo_original>
